<compile_context>
chip_gen: v6e
topology: v6e:2x2x1
jax: 0.10.0
libtpu: 0.0.40
codegen_flags: <defaults>
</compile_context>

<pallas_src>
import jax
import jax.numpy as jnp
from jax.experimental import pallas as pl
from jax.experimental.pallas import tpu as pltpu

IN_FEATURES = 28 * 28      # 784
HIDDEN = 128
OUT_FEATURES = 10
OUT_PADDED = 128           # lane-dense output width
MAX_TB = 2048              # batch tile cap (v7x-safe; bigger buys little on v5e/v6e)


def mlp_kernel(x_ref, w1_ref, w2_ref, o_ref):
    # x_ref : (TB, 784)  f32   (streamed tile; cast to bf16 on-chip)
    # w1_ref: (784, 128) bf16  (resident across the batch grid)
    # w2_ref: (128, 128) bf16  (cols 10..127 are zero padding, resident)
    # o_ref : (TB, 128)  f32   (lane-dense; wrapper slices the first 10 cols)
    x = x_ref[...].astype(jnp.bfloat16)                                       # VPU cast (free under DMA)
    h = jnp.dot(x, w1_ref[...], preferred_element_type=jnp.float32)           # MXU
    h = jnp.maximum(h, 0.0).astype(jnp.bfloat16)                              # VPU relu -> bf16
    o_ref[...] = jnp.dot(h, w2_ref[...], preferred_element_type=jnp.float32)  # MXU


def prepare_params(w1, w2):
    """One-time weight prep (outside the per-call forward).

    w1: (128, 784) PyTorch (out, in) layout, w2: (10, 128).
    Returns w1t (784, 128) bf16 and w2t_padded (128, 128) bf16 with zero pad cols.
    """
    w1t = jnp.asarray(w1.T, dtype=jnp.bfloat16)                       # (784, 128)
    w2t_padded = jnp.zeros((HIDDEN, OUT_PADDED), dtype=jnp.bfloat16)
    w2t_padded = w2t_padded.at[:, :OUT_FEATURES].set(w2.T.astype(jnp.bfloat16))
    return w1t, w2t_padded


def _round_up(a, b):
    return ((a + b - 1) // b) * b


def mynet_forward(x, w1t, w2t_padded):
    """x: [B, 784] f32.  w1t/w2t_padded from prepare_params().  Returns [B, 10] f32."""
    if x.shape[1] != IN_FEATURES:
        raise Exception(
            f"Wrong size input for x : {x.shape[1]}, expected 28*28")

    B = x.shape[0]
    # Batch tile: multiple of 8 (sublane), capped for VMEM headroom on v7x (64 MiB/TC).
    TB = min(MAX_TB, _round_up(B, 8))
    grid = (pl.cdiv(B, TB),)   # ragged last block is masked by Pallas; no jnp.pad

    cost = pl.CostEstimate(
        flops=2 * B * (IN_FEATURES * HIDDEN + HIDDEN * OUT_PADDED),
        transcendentals=0,
        bytes_accessed=(B * IN_FEATURES * 4            # x (f32, read once)
                        + IN_FEATURES * HIDDEN * 2     # w1 (bf16)
                        + HIDDEN * OUT_PADDED * 2      # w2 (bf16)
                        + B * OUT_PADDED * 4),         # out (f32)
    )

    out = pl.pallas_call(
        mlp_kernel,
        out_shape=jax.ShapeDtypeStruct((B, OUT_PADDED), jnp.float32),
        grid=grid,
        in_specs=[
            pl.BlockSpec((TB, IN_FEATURES), lambda i: (i, 0)),      # streamed x tile (f32)
            pl.BlockSpec((IN_FEATURES, HIDDEN), lambda i: (0, 0)),  # resident w1
            pl.BlockSpec((HIDDEN, OUT_PADDED), lambda i: (0, 0)),   # resident w2 (padded)
        ],
        out_specs=pl.BlockSpec((TB, OUT_PADDED), lambda i: (i, 0)),
        compiler_params=pltpu.CompilerParams(
            dimension_semantics=("parallel",),
            vmem_limit_bytes=48 * 1024 * 1024,
        ),
        cost_estimate=cost,
    )(x, w1t, w2t_padded)

    return out[:, :OUT_FEATURES]


def _bf16_reference(x, w1, w2):
    """Mirror the kernel's bf16-in / f32-accumulate path."""
    xb = x.astype(jnp.bfloat16)
    hb = jnp.maximum(
        jnp.dot(xb, w1.T.astype(jnp.bfloat16), preferred_element_type=jnp.float32), 0.0)
    return jnp.dot(hb.astype(jnp.bfloat16), w2.T.astype(jnp.bfloat16),
                   preferred_element_type=jnp.float32)


if __name__ == "__main__":
    key = jax.random.PRNGKey(0)
    kx, k1, k2, kx2 = jax.random.split(key, 4)

    # PyTorch nn.Linear(in, out).weight has shape (out, in).
    w1 = jax.random.normal(k1, (HIDDEN, IN_FEATURES), dtype=jnp.float32) * (1.0 / jnp.sqrt(IN_FEATURES))
    w2 = jax.random.normal(k2, (OUT_FEATURES, HIDDEN), dtype=jnp.float32) * (1.0 / jnp.sqrt(HIDDEN))
    w1t, w2t_padded = prepare_params(w1, w2)

    # --- Case 1: sublane-aligned batch ---
    B = 8
    x = jax.random.normal(kx, (B, IN_FEATURES), dtype=jnp.float32)
    y = jax.block_until_ready(mynet_forward(x, w1t, w2t_padded))
    assert y.shape == (B, OUT_FEATURES)
    assert jnp.allclose(y, _bf16_reference(x, w1, w2), atol=1e-2, rtol=1e-2)
    assert jnp.allclose(y, jnp.maximum(x @ w1.T, 0.0) @ w2.T, atol=1e-1, rtol=1e-1)

    # --- Case 2: ragged batch (exercises the masked last block, no jnp.pad) ---
    B2 = 12
    x2 = jax.random.normal(kx2, (B2, IN_FEATURES), dtype=jnp.float32)
    y2 = jax.block_until_ready(mynet_forward(x2, w1t, w2t_padded))
    assert y2.shape == (B2, OUT_FEATURES)
    assert jnp.allclose(y2, _bf16_reference(x2, w1, w2), atol=1e-2, rtol=1e-2)
    assert jnp.allclose(y2, jnp.maximum(x2 @ w1.T, 0.0) @ w2.T, atol=1e-1, rtol=1e-1)

    print("KERNEL_OK")
</pallas_src>

<mosaic_0001>
module attributes {stable_mosaic.version = 11 : i64} {
  func.func @mlp_kernel(%arg0: i32, %arg1: memref<8x784xf32, #tpu.memory_space<vmem>>, %arg2: memref<784x128xbf16, #tpu.memory_space<vmem>>, %arg3: memref<128x128xbf16, #tpu.memory_space<vmem>>, %arg4: memref<8x128xf32, #tpu.memory_space<vmem>>) attributes {dimension_semantics = [#tpu.dimension_semantics<parallel>], iteration_bounds = array<i64: 1>, scalar_prefetch = 0 : i64, scratch_operands = 0 : i64, tpu.core_type = #tpu.core_type<tc>, window_params = [{transform_indices = @transform_0, window_bounds = array<i64: 8, 784>}, {pipeline_mode = #tpu.pipeline_mode<synchronous>, transform_indices = @transform_1, window_bounds = array<i64: 784, 128>}, {pipeline_mode = #tpu.pipeline_mode<synchronous>, transform_indices = @transform_2, window_bounds = array<i64: 128, 128>}, {transform_indices = @transform_3, window_bounds = array<i64: 8, 128>}]} {
    %c0 = arith.constant 0 : index
    %c0_0 = arith.constant 0 : index
    %0 = vector.load %arg1[%c0, %c0_0] : memref<8x784xf32, #tpu.memory_space<vmem>>, vector<8x784xf32>
    %1 = arith.truncf %0 : vector<8x784xf32> to vector<8x784xbf16>
    %c0_1 = arith.constant 0 : index
    %c0_2 = arith.constant 0 : index
    %2 = vector.load %arg2[%c0_1, %c0_2] : memref<784x128xbf16, #tpu.memory_space<vmem>>, vector<784x128xbf16>
    %cst = arith.constant dense<0.000000e+00> : vector<8x128xf32>
    %3 = tpu.matmul %1, %2, %cst {dimension_numbers = #tpu.dot_dimension_numbers<[1], [0], [0], [1], [0, 0, 1, 1], [], []>} : vector<8x784xbf16>, vector<784x128xbf16>, vector<8x128xf32> -> vector<8x128xf32>
    %cst_3 = arith.constant 0.000000e+00 : f32
    %4 = vector.broadcast %cst_3 : f32 to vector<8x128xf32>
    %5 = arith.maximumf %3, %4 : vector<8x128xf32>
    %6 = arith.truncf %5 : vector<8x128xf32> to vector<8x128xbf16>
    %c0_4 = arith.constant 0 : index
    %c0_5 = arith.constant 0 : index
    %7 = vector.load %arg3[%c0_4, %c0_5] : memref<128x128xbf16, #tpu.memory_space<vmem>>, vector<128x128xbf16>
    %cst_6 = arith.constant dense<0.000000e+00> : vector<8x128xf32>
    %8 = tpu.matmul %6, %7, %cst_6 {dimension_numbers = #tpu.dot_dimension_numbers<[1], [0], [0], [1], [0, 0, 1, 1], [], []>} : vector<8x128xbf16>, vector<128x128xbf16>, vector<8x128xf32> -> vector<8x128xf32>
    %c0_7 = arith.constant 0 : index
    %c0_8 = arith.constant 0 : index
    %9 = vector.load %arg4[%c0_7, %c0_8] : memref<8x128xf32, #tpu.memory_space<vmem>>, vector<8x128xf32>
    tpu.vector_store %arg4[%c0_7, %c0_8], %8 {strides = array<i32>} : memref<8x128xf32, #tpu.memory_space<vmem>>, vector<8x128xf32>,
    return
  }
  func.func @transform_0(%arg0: i32) -> (i32, i32) {
    %c0_i32 = arith.constant 0 : i32
    %c0_i32_0 = arith.constant 0 : i32
    return %arg0, %c0_i32 : i32, i32
  }
  func.func @transform_1(%arg0: i32) -> (i32, i32) {
    %c0_i32 = arith.constant 0 : i32
    %c0_i32_0 = arith.constant 0 : i32
    %c0_i32_1 = arith.constant 0 : i32
    return %c0_i32, %c0_i32_0 : i32, i32
  }
  func.func @transform_2(%arg0: i32) -> (i32, i32) {
    %c0_i32 = arith.constant 0 : i32
    %c0_i32_0 = arith.constant 0 : i32
    %c0_i32_1 = arith.constant 0 : i32
    return %c0_i32, %c0_i32_0 : i32, i32
  }
  func.func @transform_3(%arg0: i32) -> (i32, i32) {
    %c0_i32 = arith.constant 0 : i32
    %c0_i32_0 = arith.constant 0 : i32
    return %arg0, %c0_i32 : i32, i32
  }
}

</mosaic_0001>

<llo_original>
// kernel: tpu_custom_call.1
$region0: #{tpu_custom_call.1}
  #allocation0 [shape = 'u32[]', space=smem, size = 0x4, offset = 0x4, fixed_abs, tag = 'smem constant byte address 0x4 - core index']
  #allocation1 [shape = 'u32[144,128]{1,0:T(1,128)}', space=vmem, size = 0x12000, scoped, tag = 'internal scratch']
  %s0 = inlined_call_operand.hbm [shape: f32[8,784], index: 0, kind: input, shape index: {}]
  %s1 = inlined_call_operand.hbm [shape: bf16[784,128], index: 1, kind: input, shape index: {}]
  %s2 = inlined_call_operand.hbm [shape: bf16[128,128], index: 2, kind: input, shape index: {}]
  %s3 = inlined_call_operand.hbm [shape: f32[8,128], index: 3, kind: output, shape index: {}]
  %s4 = sld [smem:[#allocation0]]
  $region34: #{tpu_custom_call.1} parent=0
    _
  %s6 = ssub.s32 1, %s4
  %s7 = scalar_select 0, %s6, %s4
  $region1: #{tpu_custom_call.1} parent=0
    #allocation2 [shape = 'u8[28672]{0}', space=vmem, size = 0x7000, scoped, tag = 'input window, operand 0, single buffered']
    #allocation3 [shape = 's32[1]{0}', space=sflag, size = 0x4, scoped, tag = 'scoped memory for tpu_custom_call.1']
    #allocation4 [shape = 's32[1]{0}', space=sflag, size = 0x4, scoped, tag = 'scoped memory for tpu_custom_call.1']
    #allocation5 [shape = 'u8[200704]{0}', space=vmem, size = 0x31000, scoped, tag = 'input window, operand 1, single buffered']
    #allocation6 [shape = 's32[1]{0}', space=sflag, size = 0x4, scoped, tag = 'scoped memory for tpu_custom_call.1']
    #allocation7 [shape = 'u8[32768]{0}', space=vmem, size = 0x8000, scoped, tag = 'input window, operand 2, single buffered']
    #allocation8 [shape = 'u8[4096]{0}', space=vmem, size = 0x1000, scoped, tag = 'output window, operand 0, single buffered']
    %8 = vsyncpa [#allocation3], 0
    %9 = vsyncpa [#allocation6], 0
    %10 = vsyncpa [#allocation4], 0
    // Predicated region
    $region2: #{tpu_custom_call.1} parent=1 // pred_check
      _
    $region3: #{tpu_custom_call.1} parent=1 // pred_check_branch
      %12 = sbr.rel (0) target = $region5
    $region4: #{tpu_custom_call.1} parent=1 // pred_region
      %s14 = ssub.s32 896, 896
      %15 = vsyncadd [#allocation3], %s14
      %s17 = sshll.u32 [#allocation2], 4
      %s18 = int_to_ptr.vmem [resolvable:$true] %s17
      %20 = dma.hbm_to_vmem [thread:$0]  %s0, 896, %s18, [#allocation3]
    $region5: #{tpu_custom_call.1} parent=1 // pred_fallthru
      _
    // Predicated region
    $region6: #{tpu_custom_call.1} parent=1 // pred_check
      _
    $region7: #{tpu_custom_call.1} parent=1 // pred_check_branch
      %22 = sbr.rel (0) target = $region9
    $region8: #{tpu_custom_call.1} parent=1 // pred_region
      %s24 = ssub.s32 6272, 6272
      %25 = vsyncadd [#allocation6], %s24
      %s26 = sshll.u32 [#allocation5], 4
      %s27 = int_to_ptr.vmem [resolvable:$true] %s26
      %32 = dma.hbm_to_vmem [thread:$0]  %s1, 6272, %s27, [#allocation6], 64, 64, 4
    $region9: #{tpu_custom_call.1} parent=1 // pred_fallthru
      _
    // Predicated region
    $region10: #{tpu_custom_call.1} parent=1 // pred_check
      _
    $region11: #{tpu_custom_call.1} parent=1 // pred_check_branch
      %34 = sbr.rel (0) target = $region13
    $region12: #{tpu_custom_call.1} parent=1 // pred_region
      %s36 = ssub.s32 1024, 1024
      %37 = vsyncadd [#allocation6], %s36
      %s38 = sshll.u32 [#allocation7], 4
      %s39 = int_to_ptr.vmem [resolvable:$true] %s38
      %44 = dma.hbm_to_vmem [thread:$0]  %s2, 1024, %s39, [#allocation6], 64, 64, 4
    $region13: #{tpu_custom_call.1} parent=1 // pred_fallthru
      _
    // Predicated region
    $region14: #{tpu_custom_call.1} parent=1 // pred_check
      _
    $region15: #{tpu_custom_call.1} parent=1 // pred_check_branch
      %46 = sbr.rel (0) target = $region17
    $region16: #{tpu_custom_call.1} parent=1 // pred_region
      %47 = dma.done [#allocation3], 896
    $region17: #{tpu_custom_call.1} parent=1 // pred_fallthru
      _
    // Predicated region
    $region18: #{tpu_custom_call.1} parent=1 // pred_check
      _
    $region19: #{tpu_custom_call.1} parent=1 // pred_check_branch
      %49 = sbr.rel (0) target = $region21
    $region20: #{tpu_custom_call.1} parent=1 // pred_region
      %50 = dma.done [#allocation6], 6272
    $region21: #{tpu_custom_call.1} parent=1 // pred_fallthru
      _
    // Predicated region
    $region22: #{tpu_custom_call.1} parent=1 // pred_check
      _
    $region23: #{tpu_custom_call.1} parent=1 // pred_check_branch
      %52 = sbr.rel (0) target = $region25
    $region24: #{tpu_custom_call.1} parent=1 // pred_region
      %53 = dma.done [#allocation6], 1024
    $region25: #{tpu_custom_call.1} parent=1 // pred_fallthru
      _
    %v55 = vld [vmem:[#allocation2] sm:$0xff]
    %v56 = vld [vmem:[#allocation2 + $0x8] sm:$0xff]
    %v57 = vld [vmem:[#allocation2 + $0x10] sm:$0xff]
    %v58 = vld [vmem:[#allocation2 + $0x18] sm:$0xff]
    %v59 = vld [vmem:[#allocation2 + $0x20] sm:$0xff]
    %v60 = vld [vmem:[#allocation2 + $0x28] sm:$0xff]
    %v61 = vld [vmem:[#allocation2 + $0x30] sm:$0xff]
    %v62 = vpack.c.bf16 %v55, %v55
    %v63 = vpack.c.bf16 %v56, %v56
    %v64 = vpack.c.bf16 %v57, %v57
    %v65 = vpack.c.bf16 %v58, %v58
    %v66 = vpack.c.bf16 %v59, %v59
    %v67 = vpack.c.bf16 %v60, %v60
    %v68 = vpack.c.bf16 %v61, %v61
    %v69 = vld [vmem:[#allocation5] sm:$0xf]
    %v70 = vld [vmem:[#allocation5 + $0x4] sm:$0xf]
    %v71 = vld [vmem:[#allocation5 + $0x8] sm:$0xf]
    %v72 = vld [vmem:[#allocation5 + $0xc] sm:$0xf]
    %v73 = vld [vmem:[#allocation5 + $0x10] sm:$0xf]
    %v74 = vld [vmem:[#allocation5 + $0x14] sm:$0xf]
    %v75 = vld [vmem:[#allocation5 + $0x18] sm:$0xf]
    %v76 = vld [vmem:[#allocation5 + $0x1c] sm:$0xf]
    %v77 = vld [vmem:[#allocation5 + $0x20] sm:$0xf]
    %v78 = vld [vmem:[#allocation5 + $0x24] sm:$0xf]
    %v79 = vld [vmem:[#allocation5 + $0x28] sm:$0xf]
    %v80 = vld [vmem:[#allocation5 + $0x2c] sm:$0xf]
    %v81 = vld [vmem:[#allocation5 + $0x30] sm:$0xf]
    %v82 = vld [vmem:[#allocation5 + $0x34] sm:$0xf]
    %v83 = vld [vmem:[#allocation5 + $0x38] sm:$0xf]
    %v84 = vld [vmem:[#allocation5 + $0x3c] sm:$0xf]
    %v85 = vld [vmem:[#allocation5 + $0x40] sm:$0xf]
    %v86 = vld [vmem:[#allocation5 + $0x44] sm:$0xf]
    %v87 = vld [vmem:[#allocation5 + $0x48] sm:$0xf]
    %v88 = vld [vmem:[#allocation5 + $0x4c] sm:$0xf]
    %v89 = vld [vmem:[#allocation5 + $0x50] sm:$0xf]
    %v90 = vld [vmem:[#allocation5 + $0x54] sm:$0xf]
    %v91 = vld [vmem:[#allocation5 + $0x58] sm:$0xf]
    %v92 = vld [vmem:[#allocation5 + $0x5c] sm:$0xf]
    %v93 = vld [vmem:[#allocation5 + $0x60] sm:$0xf]
    %v94 = vld [vmem:[#allocation5 + $0x64] sm:$0xf]
    %v95 = vld [vmem:[#allocation5 + $0x68] sm:$0xf]
    %v96 = vld [vmem:[#allocation5 + $0x6c] sm:$0xf]
    %v97 = vld [vmem:[#allocation5 + $0x70] sm:$0xf]
    %v98 = vld [vmem:[#allocation5 + $0x74] sm:$0xf]
    %v99 = vld [vmem:[#allocation5 + $0x78] sm:$0xf]
    %v100 = vld [vmem:[#allocation5 + $0x7c] sm:$0xf]
    %v101 = vld [vmem:[#allocation5 + $0x80] sm:$0xf]
    %v102 = vld [vmem:[#allocation5 + $0x84] sm:$0xf]
    %v103 = vld [vmem:[#allocation5 + $0x88] sm:$0xf]
    %v104 = vld [vmem:[#allocation5 + $0x8c] sm:$0xf]
    %v105 = vld [vmem:[#allocation5 + $0x90] sm:$0xf]
    %v106 = vld [vmem:[#allocation5 + $0x94] sm:$0xf]
    %v107 = vld [vmem:[#allocation5 + $0x98] sm:$0xf]
    %v108 = vld [vmem:[#allocation5 + $0x9c] sm:$0xf]
    %v109 = vld [vmem:[#allocation5 + $0xa0] sm:$0xf]
    %v110 = vld [vmem:[#allocation5 + $0xa4] sm:$0xf]
    %v111 = vld [vmem:[#allocation5 + $0xa8] sm:$0xf]
    %v112 = vld [vmem:[#allocation5 + $0xac] sm:$0xf]
    %v113 = vld [vmem:[#allocation5 + $0xb0] sm:$0xf]
    %v114 = vld [vmem:[#allocation5 + $0xb4] sm:$0xf]
    %v115 = vld [vmem:[#allocation5 + $0xb8] sm:$0xf]
    %v116 = vld [vmem:[#allocation5 + $0xbc] sm:$0xf]
    %v117 = vld [vmem:[#allocation5 + $0xc0] sm:$0xf]
    %v118 = vld [vmem:[#allocation5 + $0xc4] sm:$0xf]
    %v119 = vld [vmem:[#allocation5 + $0xc8] sm:$0xf]
    %v120 = vld [vmem:[#allocation5 + $0xcc] sm:$0xf]
    %v121 = vld [vmem:[#allocation5 + $0xd0] sm:$0xf]
    %v122 = vld [vmem:[#allocation5 + $0xd4] sm:$0xf]
    %v123 = vld [vmem:[#allocation5 + $0xd8] sm:$0xf]
    %v124 = vld [vmem:[#allocation5 + $0xdc] sm:$0xf]
    %v125 = vld [vmem:[#allocation5 + $0xe0] sm:$0xf]
    %v126 = vld [vmem:[#allocation5 + $0xe4] sm:$0xf]
    %v127 = vld [vmem:[#allocation5 + $0xe8] sm:$0xf]
    %v128 = vld [vmem:[#allocation5 + $0xec] sm:$0xf]
    %v129 = vld [vmem:[#allocation5 + $0xf0] sm:$0xf]
    %v130 = vld [vmem:[#allocation5 + $0xf4] sm:$0xf]
    %v131 = vld [vmem:[#allocation5 + $0xf8] sm:$0xf]
    %v132 = vld [vmem:[#allocation5 + $0xfc] sm:$0xf]
    %v133 = vld [vmem:[#allocation5 + $0x100] sm:$0xf]
    %v134 = vld [vmem:[#allocation5 + $0x104] sm:$0xf]
    %v135 = vld [vmem:[#allocation5 + $0x108] sm:$0xf]
    %v136 = vld [vmem:[#allocation5 + $0x10c] sm:$0xf]
    %v137 = vld [vmem:[#allocation5 + $0x110] sm:$0xf]
    %v138 = vld [vmem:[#allocation5 + $0x114] sm:$0xf]
    %v139 = vld [vmem:[#allocation5 + $0x118] sm:$0xf]
    %v140 = vld [vmem:[#allocation5 + $0x11c] sm:$0xf]
    %v141 = vld [vmem:[#allocation5 + $0x120] sm:$0xf]
    %v142 = vld [vmem:[#allocation5 + $0x124] sm:$0xf]
    %v143 = vld [vmem:[#allocation5 + $0x128] sm:$0xf]
    %v144 = vld [vmem:[#allocation5 + $0x12c] sm:$0xf]
    %v145 = vld [vmem:[#allocation5 + $0x130] sm:$0xf]
    %v146 = vld [vmem:[#allocation5 + $0x134] sm:$0xf]
    %v147 = vld [vmem:[#allocation5 + $0x138] sm:$0xf]
    %v148 = vld [vmem:[#allocation5 + $0x13c] sm:$0xf]
    %v149 = vld [vmem:[#allocation5 + $0x140] sm:$0xf]
    %v150 = vld [vmem:[#allocation5 + $0x144] sm:$0xf]
    %v151 = vld [vmem:[#allocation5 + $0x148] sm:$0xf]
    %v152 = vld [vmem:[#allocation5 + $0x14c] sm:$0xf]
    %v153 = vld [vmem:[#allocation5 + $0x150] sm:$0xf]
    %v154 = vld [vmem:[#allocation5 + $0x154] sm:$0xf]
    %v155 = vld [vmem:[#allocation5 + $0x158] sm:$0xf]
    %v156 = vld [vmem:[#allocation5 + $0x15c] sm:$0xf]
    %v157 = vld [vmem:[#allocation5 + $0x160] sm:$0xf]
    %v158 = vld [vmem:[#allocation5 + $0x164] sm:$0xf]
    %v159 = vld [vmem:[#allocation5 + $0x168] sm:$0xf]
    %v160 = vld [vmem:[#allocation5 + $0x16c] sm:$0xf]
    %v161 = vld [vmem:[#allocation5 + $0x170] sm:$0xf]
    %v162 = vld [vmem:[#allocation5 + $0x174] sm:$0xf]
    %v163 = vld [vmem:[#allocation5 + $0x178] sm:$0xf]
    %v164 = vld [vmem:[#allocation5 + $0x17c] sm:$0xf]
    %v165 = vld [vmem:[#allocation5 + $0x180] sm:$0xf]
    %v166 = vld [vmem:[#allocation5 + $0x184] sm:$0xf]
    %v265 = vunpack.c.l.b16 %v69
    %v266 = vunpack.c.l.b16 %v70
    %v267 = vunpack.c.l.b16 %v71
    %v268 = vunpack.c.l.b16 %v72
    %v269 = vunpack.c.l.b16 %v73
    %v270 = vunpack.c.l.b16 %v74
    %v271 = vunpack.c.l.b16 %v75
    %v272 = vunpack.c.l.b16 %v76
    %v273 = vunpack.c.l.b16 %v77
    %v274 = vunpack.c.l.b16 %v78
    %v275 = vunpack.c.l.b16 %v79
    %v276 = vunpack.c.l.b16 %v80
    %v277 = vunpack.c.l.b16 %v81
    %v278 = vunpack.c.l.b16 %v82
    %v279 = vunpack.c.l.b16 %v83
    %v280 = vunpack.c.l.b16 %v84
    %v281 = vunpack.c.l.b16 %v85
    %v282 = vunpack.c.l.b16 %v86
    %v283 = vunpack.c.l.b16 %v87
    %v284 = vunpack.c.l.b16 %v88
    %v285 = vunpack.c.l.b16 %v89
    %v286 = vunpack.c.l.b16 %v90
    %v287 = vunpack.c.l.b16 %v91
    %v288 = vunpack.c.l.b16 %v92
    %v289 = vunpack.c.l.b16 %v93
    %v290 = vunpack.c.l.b16 %v94
    %v291 = vunpack.c.l.b16 %v95
    %v292 = vunpack.c.l.b16 %v96
    %v293 = vunpack.c.l.b16 %v97
    %v294 = vunpack.c.l.b16 %v98
    %v295 = vunpack.c.l.b16 %v99
    %v296 = vunpack.c.l.b16 %v100
    %v297 = vunpack.c.l.b16 %v101
    %v298 = vunpack.c.l.b16 %v102
    %v299 = vunpack.c.l.b16 %v103
    %v300 = vunpack.c.l.b16 %v104
    %v301 = vunpack.c.l.b16 %v105
    %v302 = vunpack.c.l.b16 %v106
    %v303 = vunpack.c.l.b16 %v107
    %v304 = vunpack.c.l.b16 %v108
    %v305 = vunpack.c.l.b16 %v109
    %v306 = vunpack.c.l.b16 %v110
    %v307 = vunpack.c.l.b16 %v111
    %v308 = vunpack.c.l.b16 %v112
    %v309 = vunpack.c.l.b16 %v113
    %v310 = vunpack.c.l.b16 %v114
    %v311 = vunpack.c.l.b16 %v115
    %v312 = vunpack.c.l.b16 %v116
    %v313 = vunpack.c.l.b16 %v117
    %v314 = vunpack.c.l.b16 %v118
    %v315 = vunpack.c.l.b16 %v119
    %v316 = vunpack.c.l.b16 %v120
    %v317 = vunpack.c.l.b16 %v121
    %v318 = vunpack.c.l.b16 %v122
    %v319 = vunpack.c.l.b16 %v123
    %v320 = vunpack.c.l.b16 %v124
    %v321 = vunpack.c.l.b16 %v125
    %v322 = vunpack.c.l.b16 %v126
    %v323 = vunpack.c.l.b16 %v127
    %v324 = vunpack.c.l.b16 %v128
    %v325 = vunpack.c.l.b16 %v129
    %v326 = vunpack.c.l.b16 %v130
    %v327 = vunpack.c.l.b16 %v131
    %v328 = vunpack.c.l.b16 %v132
    %v329 = vunpack.c.l.b16 %v133
    %v330 = vunpack.c.l.b16 %v134
    %v331 = vunpack.c.l.b16 %v135
    %v332 = vunpack.c.l.b16 %v136
    %v333 = vunpack.c.l.b16 %v137
    %v334 = vunpack.c.l.b16 %v138
    %v335 = vunpack.c.l.b16 %v139
    %v336 = vunpack.c.l.b16 %v140
    %v337 = vunpack.c.l.b16 %v141
    %v338 = vunpack.c.l.b16 %v142
    %v339 = vunpack.c.l.b16 %v143
    %v340 = vunpack.c.l.b16 %v144
    %v341 = vunpack.c.l.b16 %v145
    %v342 = vunpack.c.l.b16 %v146
    %v343 = vunpack.c.l.b16 %v147
    %v344 = vunpack.c.l.b16 %v148
    %v345 = vunpack.c.l.b16 %v149
    %v346 = vunpack.c.l.b16 %v150
    %v347 = vunpack.c.l.b16 %v151
    %v348 = vunpack.c.l.b16 %v152
    %v349 = vunpack.c.l.b16 %v153
    %v350 = vunpack.c.l.b16 %v154
    %v351 = vunpack.c.l.b16 %v155
    %v352 = vunpack.c.l.b16 %v156
    %v353 = vunpack.c.l.b16 %v157
    %v354 = vunpack.c.l.b16 %v158
    %v355 = vunpack.c.l.b16 %v159
    %v356 = vunpack.c.l.b16 %v160
    %v357 = vunpack.c.l.b16 %v161
    %v358 = vunpack.c.l.b16 %v162
    %v359 = vunpack.c.l.b16 %v163
    %v360 = vunpack.c.l.b16 %v164
    %v361 = vunpack.c.l.b16 %v165
    %v362 = vunpack.c.l.b16 %v166
    %v363 = vpack.c.b16 %v266, %v265
    %v364 = vpack.c.b16 %v268, %v267
    %v365 = vpack.c.b16 %v270, %v269
    %v366 = vpack.c.b16 %v272, %v271
    %v367 = vpack.c.b16 %v274, %v273
    %v368 = vpack.c.b16 %v276, %v275
    %v369 = vpack.c.b16 %v278, %v277
    %v370 = vpack.c.b16 %v280, %v279
    %v371 = vpack.c.b16 %v282, %v281
    %v372 = vpack.c.b16 %v284, %v283
    %v373 = vpack.c.b16 %v286, %v285
    %v374 = vpack.c.b16 %v288, %v287
    %v375 = vpack.c.b16 %v290, %v289
    %v376 = vpack.c.b16 %v292, %v291
    %v377 = vpack.c.b16 %v294, %v293
    %v378 = vpack.c.b16 %v296, %v295
    %v379 = vpack.c.b16 %v298, %v297
    %v380 = vpack.c.b16 %v300, %v299
    %v381 = vpack.c.b16 %v302, %v301
    %v382 = vpack.c.b16 %v304, %v303
    %v383 = vpack.c.b16 %v306, %v305
    %v384 = vpack.c.b16 %v308, %v307
    %v385 = vpack.c.b16 %v310, %v309
    %v386 = vpack.c.b16 %v312, %v311
    %v387 = vpack.c.b16 %v314, %v313
    %v388 = vpack.c.b16 %v316, %v315
    %v389 = vpack.c.b16 %v318, %v317
    %v390 = vpack.c.b16 %v320, %v319
    %v391 = vpack.c.b16 %v322, %v321
    %v392 = vpack.c.b16 %v324, %v323
    %v393 = vpack.c.b16 %v326, %v325
    %v394 = vpack.c.b16 %v328, %v327
    %v395 = vpack.c.b16 %v330, %v329
    %v396 = vpack.c.b16 %v332, %v331
    %v397 = vpack.c.b16 %v334, %v333
    %v398 = vpack.c.b16 %v336, %v335
    %v399 = vpack.c.b16 %v338, %v337
    %v400 = vpack.c.b16 %v340, %v339
    %v401 = vpack.c.b16 %v342, %v341
    %v402 = vpack.c.b16 %v344, %v343
    %v403 = vpack.c.b16 %v346, %v345
    %v404 = vpack.c.b16 %v348, %v347
    %v405 = vpack.c.b16 %v350, %v349
    %v406 = vpack.c.b16 %v352, %v351
    %v407 = vpack.c.b16 %v354, %v353
    %v408 = vpack.c.b16 %v356, %v355
    %v409 = vpack.c.b16 %v358, %v357
    %v410 = vpack.c.b16 %v360, %v359
    %v411 = vpack.c.b16 %v362, %v361
    %vm461 = vcmask 130048
    %v463 = vsel %vm461, %v68, 0
    %465 = vmatprep.subr.bf16.mxu0 0
    %466 = vmatpush1.bf16.msra.mxu0 %v370
    %467 = vmatprep.subr.bf16.mxu0 0
    %468 = vmatpush1.bf16.msra.mxu0 %v369
    %469 = vmatprep.subr.bf16.mxu0 0
    %470 = vmatpush1.bf16.msra.mxu0 %v368
    %471 = vmatprep.subr.bf16.mxu0 0
    %472 = vmatpush1.bf16.msra.mxu0 %v367
    %473 = vmatprep.subr.bf16.mxu0 0
    %474 = vmatpush1.bf16.msra.mxu0 %v366
    %475 = vmatprep.subr.bf16.mxu0 0
    %476 = vmatpush1.bf16.msra.mxu0 %v365
    %477 = vmatprep.subr.bf16.mxu0 0
    %478 = vmatpush1.bf16.msra.mxu0 %v364
    %479 = vmatprep.subr.bf16.mxu0 0
    %480 = vmatpush1.bf16.msra.mxu0 %v363
    %481 = vmatprep.subr.bf16.mxu0 0
    %482 = vmatpush2.bf16.msra.mxu0 %v378
    %483 = vmatprep.subr.bf16.mxu0 0
    %484 = vmatpush2.bf16.msra.mxu0 %v377
    %485 = vmatprep.subr.bf16.mxu0 0
    %486 = vmatpush2.bf16.msra.mxu0 %v376
    %487 = vmatprep.subr.bf16.mxu0 0
    %488 = vmatpush2.bf16.msra.mxu0 %v375
    %489 = vmatprep.subr.bf16.mxu0 0
    %490 = vmatpush2.bf16.msra.mxu0 %v374
    %491 = vmatprep.subr.bf16.mxu0 0
    %492 = vmatpush2.bf16.msra.mxu0 %v373
    %493 = vmatprep.subr.bf16.mxu0 0
    %494 = vmatpush2.bf16.msra.mxu0 %v372
    %495 = vmatprep.subr.bf16.mxu0 0
    %496 = vmatpush2.bf16.msra.mxu0 %v371
    %497 = vmatprep.mubr.bf16.mxu0 %v63
    %498 = vmatmul.mubr.bf16.gmra.mxu0 %v62
    %v499 = vpop.f32.mrf.mxu0
    %v500 = vadd.f32 0.0, %v499
    %v501 = vpop.f32.mrf.mxu0
    %v502 = vpop.f32.mrf.mxu0
    %v503 = vpop.f32.mrf.mxu0
    %504 = vdwg.mxu0
    %505 = vmatprep.subr.bf16.mxu0 0
    %506 = vmatpush1.bf16.msra.mxu0 %v386
    %507 = vmatprep.subr.bf16.mxu0 0
    %508 = vmatpush1.bf16.msra.mxu0 %v385
    %509 = vmatprep.subr.bf16.mxu0 0
    %510 = vmatpush1.bf16.msra.mxu0 %v384
    %511 = vmatprep.subr.bf16.mxu0 0
    %512 = vmatpush1.bf16.msra.mxu0 %v383
    %513 = vmatprep.subr.bf16.mxu0 0
    %514 = vmatpush1.bf16.msra.mxu0 %v382
    %515 = vmatprep.subr.bf16.mxu0 0
    %516 = vmatpush1.bf16.msra.mxu0 %v381
    %517 = vmatprep.subr.bf16.mxu0 0
    %518 = vmatpush1.bf16.msra.mxu0 %v380
    %519 = vmatprep.subr.bf16.mxu0 0
    %520 = vmatpush1.bf16.msra.mxu0 %v379
    %521 = vmatprep.subr.bf16.mxu0 0
    %522 = vmatpush2.bf16.msra.mxu0 %v394
    %523 = vmatprep.subr.bf16.mxu0 0
    %524 = vmatpush2.bf16.msra.mxu0 %v393
    %525 = vmatprep.subr.bf16.mxu0 0
    %526 = vmatpush2.bf16.msra.mxu0 %v392
    %527 = vmatprep.subr.bf16.mxu0 0
    %528 = vmatpush2.bf16.msra.mxu0 %v391
    %529 = vmatprep.subr.bf16.mxu0 0
    %530 = vmatpush2.bf16.msra.mxu0 %v390
    %531 = vmatprep.subr.bf16.mxu0 0
    %532 = vmatpush2.bf16.msra.mxu0 %v389
    %533 = vmatprep.subr.bf16.mxu0 0
    %534 = vmatpush2.bf16.msra.mxu0 %v388
    %535 = vmatprep.subr.bf16.mxu0 0
    %536 = vmatpush2.bf16.msra.mxu0 %v387
    %537 = vmatprep.mubr.bf16.mxu0 %v65
    %538 = vmatmul.mubr.bf16.gmra.mxu0 %v64
    %v539 = vpop.f32.mrf.mxu0
    %v540 = vadd.f32 %v500, %v539
    %v541 = vpop.f32.mrf.mxu0
    %v542 = vpop.f32.mrf.mxu0
    %v543 = vpop.f32.mrf.mxu0
    %544 = vdwg.mxu0
    %545 = vmatprep.subr.bf16.mxu0 0
    %546 = vmatpush1.bf16.msra.mxu0 %v402
    %547 = vmatprep.subr.bf16.mxu0 0
    %548 = vmatpush1.bf16.msra.mxu0 %v401
    %549 = vmatprep.subr.bf16.mxu0 0
    %550 = vmatpush1.bf16.msra.mxu0 %v400
    %551 = vmatprep.subr.bf16.mxu0 0
    %552 = vmatpush1.bf16.msra.mxu0 %v399
    %553 = vmatprep.subr.bf16.mxu0 0
    %554 = vmatpush1.bf16.msra.mxu0 %v398
    %555 = vmatprep.subr.bf16.mxu0 0
    %556 = vmatpush1.bf16.msra.mxu0 %v397
    %557 = vmatprep.subr.bf16.mxu0 0
    %558 = vmatpush1.bf16.msra.mxu0 %v396
    %559 = vmatprep.subr.bf16.mxu0 0
    %560 = vmatpush1.bf16.msra.mxu0 %v395
    %561 = vmatprep.subr.bf16.mxu0 0
    %562 = vmatpush2.bf16.msra.mxu0 %v410
    %563 = vmatprep.subr.bf16.mxu0 0
    %564 = vmatpush2.bf16.msra.mxu0 %v409
    %565 = vmatprep.subr.bf16.mxu0 0
    %566 = vmatpush2.bf16.msra.mxu0 %v408
    %567 = vmatprep.subr.bf16.mxu0 0
    %568 = vmatpush2.bf16.msra.mxu0 %v407
    %569 = vmatprep.subr.bf16.mxu0 0
    %570 = vmatpush2.bf16.msra.mxu0 %v406
    %571 = vmatprep.subr.bf16.mxu0 0
    %572 = vmatpush2.bf16.msra.mxu0 %v405
    %573 = vmatprep.subr.bf16.mxu0 0
    %574 = vmatpush2.bf16.msra.mxu0 %v404
    %575 = vmatprep.subr.bf16.mxu0 0
    %576 = vmatpush2.bf16.msra.mxu0 %v403
    %577 = vmatprep.mubr.bf16.mxu0 %v67
    %578 = vmatmul.mubr.bf16.gmra.mxu0 %v66
    %v579 = vpop.f32.mrf.mxu0
    %v580 = vadd.f32 %v540, %v579
    %v581 = vpop.f32.mrf.mxu0
    %v582 = vpop.f32.mrf.mxu0
    %v583 = vpop.f32.mrf.mxu0
    %584 = vdwg.mxu0
    %585 = vmatprep.subr.bf16.mxu0 0
    %586 = vmatpush1.bf16.msra.mxu0 0
    %587 = vmatprep.subr.bf16.mxu0 0
    %588 = vmatpush1.bf16.msra.mxu0 0
    %589 = vmatprep.subr.bf16.mxu0 0
    %590 = vmatpush1.bf16.msra.mxu0 0
    %591 = vmatprep.subr.bf16.mxu0 0
    %592 = vmatpush1.bf16.msra.mxu0 0
    %593 = vmatprep.subr.bf16.mxu0 0
    %594 = vmatpush1.bf16.msra.mxu0 0
    %595 = vmatprep.subr.bf16.mxu0 0
    %596 = vmatpush1.bf16.msra.mxu0 0
    %597 = vmatprep.subr.bf16.mxu0 0
    %598 = vmatpush1.bf16.msra.mxu0 0
    %599 = vmatprep.subr.bf16.mxu0 0
    %600 = vmatpush1.bf16.msra.mxu0 %v411
    %601 = vmatprep.subr.bf16.mxu0 0
    %602 = vmatpush2.bf16.msra.mxu0 0
    %603 = vmatprep.subr.bf16.mxu0 0
    %604 = vmatpush2.bf16.msra.mxu0 0
    %605 = vmatprep.subr.bf16.mxu0 0
    %606 = vmatpush2.bf16.msra.mxu0 0
    %607 = vmatprep.subr.bf16.mxu0 0
    %608 = vmatpush2.bf16.msra.mxu0 0
    %609 = vmatprep.subr.bf16.mxu0 0
    %610 = vmatpush2.bf16.msra.mxu0 0
    %611 = vmatprep.subr.bf16.mxu0 0
    %612 = vmatpush2.bf16.msra.mxu0 0
    %613 = vmatprep.subr.bf16.mxu0 0
    %614 = vmatpush2.bf16.msra.mxu0 0
    %615 = vmatprep.subr.bf16.mxu0 0
    %616 = vmatpush2.bf16.msra.mxu0 0
    %617 = vmatprep.mubr.bf16.mxu0 0
    %618 = vmatmul.mubr.bf16.gmra.mxu0 %v463
    %v619 = vpop.f32.mrf.mxu0
    %v620 = vadd.f32 %v580, %v619
    %v621 = vpop.f32.mrf.mxu0
    %v622 = vpop.f32.mrf.mxu0
    %v623 = vpop.f32.mrf.mxu0
    %624 = vdwg.mxu0
    %v625 = vmax.f32 %v620, 0.0
    %v626 = vpack.c.bf16 %v625, %v625
    %v627 = vld [vmem:[#allocation7] sm:$0xf]
    %v628 = vld [vmem:[#allocation7 + $0x4] sm:$0xf]
    %v629 = vld [vmem:[#allocation7 + $0x8] sm:$0xf]
    %v630 = vld [vmem:[#allocation7 + $0xc] sm:$0xf]
    %v631 = vld [vmem:[#allocation7 + $0x10] sm:$0xf]
    %v632 = vld [vmem:[#allocation7 + $0x14] sm:$0xf]
    %v633 = vld [vmem:[#allocation7 + $0x18] sm:$0xf]
    %v634 = vld [vmem:[#allocation7 + $0x1c] sm:$0xf]
    %v635 = vld [vmem:[#allocation7 + $0x20] sm:$0xf]
    %v636 = vld [vmem:[#allocation7 + $0x24] sm:$0xf]
    %v637 = vld [vmem:[#allocation7 + $0x28] sm:$0xf]
    %v638 = vld [vmem:[#allocation7 + $0x2c] sm:$0xf]
    %v639 = vld [vmem:[#allocation7 + $0x30] sm:$0xf]
    %v640 = vld [vmem:[#allocation7 + $0x34] sm:$0xf]
    %v641 = vld [vmem:[#allocation7 + $0x38] sm:$0xf]
    %v642 = vld [vmem:[#allocation7 + $0x3c] sm:$0xf]
    %v659 = vunpack.c.l.b16 %v627
    %v660 = vunpack.c.l.b16 %v628
    %v661 = vunpack.c.l.b16 %v629
    %v662 = vunpack.c.l.b16 %v630
    %v663 = vunpack.c.l.b16 %v631
    %v664 = vunpack.c.l.b16 %v632
    %v665 = vunpack.c.l.b16 %v633
    %v666 = vunpack.c.l.b16 %v634
    %v667 = vunpack.c.l.b16 %v635
    %v668 = vunpack.c.l.b16 %v636
    %v669 = vunpack.c.l.b16 %v637
    %v670 = vunpack.c.l.b16 %v638
    %v671 = vunpack.c.l.b16 %v639
    %v672 = vunpack.c.l.b16 %v640
    %v673 = vunpack.c.l.b16 %v641
    %v674 = vunpack.c.l.b16 %v642
    %v675 = vpack.c.b16 %v660, %v659
    %v676 = vpack.c.b16 %v662, %v661
    %v677 = vpack.c.b16 %v664, %v663
    %v678 = vpack.c.b16 %v666, %v665
    %v679 = vpack.c.b16 %v668, %v667
    %v680 = vpack.c.b16 %v670, %v669
    %v681 = vpack.c.b16 %v672, %v671
    %v682 = vpack.c.b16 %v674, %v673
    %691 = vmatprep.subr.bf16.mxu0 0
    %692 = vmatpush1.bf16.msra.mxu0 %v682
    %693 = vmatprep.subr.bf16.mxu0 0
    %694 = vmatpush1.bf16.msra.mxu0 %v681
    %695 = vmatprep.subr.bf16.mxu0 0
    %696 = vmatpush1.bf16.msra.mxu0 %v680
    %697 = vmatprep.subr.bf16.mxu0 0
    %698 = vmatpush1.bf16.msra.mxu0 %v679
    %699 = vmatprep.subr.bf16.mxu0 0
    %700 = vmatpush1.bf16.msra.mxu0 %v678
    %701 = vmatprep.subr.bf16.mxu0 0
    %702 = vmatpush1.bf16.msra.mxu0 %v677
    %703 = vmatprep.subr.bf16.mxu0 0
    %704 = vmatpush1.bf16.msra.mxu0 %v676
    %705 = vmatprep.subr.bf16.mxu0 0
    %706 = vmatpush1.bf16.msra.mxu0 %v675
    %707 = vmatprep.subr.bf16.mxu0 0
    %708 = vmatpush2.bf16.msra.mxu0 0
    %709 = vmatprep.subr.bf16.mxu0 0
    %710 = vmatpush2.bf16.msra.mxu0 0
    %711 = vmatprep.subr.bf16.mxu0 0
    %712 = vmatpush2.bf16.msra.mxu0 0
    %713 = vmatprep.subr.bf16.mxu0 0
    %714 = vmatpush2.bf16.msra.mxu0 0
    %715 = vmatprep.subr.bf16.mxu0 0
    %716 = vmatpush2.bf16.msra.mxu0 0
    %717 = vmatprep.subr.bf16.mxu0 0
    %718 = vmatpush2.bf16.msra.mxu0 0
    %719 = vmatprep.subr.bf16.mxu0 0
    %720 = vmatpush2.bf16.msra.mxu0 0
    %721 = vmatprep.subr.bf16.mxu0 0
    %722 = vmatpush2.bf16.msra.mxu0 0
    %723 = vmatprep.mubr.bf16.mxu0 0
    %724 = vmatmul.mubr.bf16.gmra.mxu0 %v626
    %v725 = vpop.f32.mrf.mxu0
    %v726 = vadd.f32 0.0, %v725
    %v727 = vpop.f32.mrf.mxu0
    %v728 = vpop.f32.mrf.mxu0
    %v729 = vpop.f32.mrf.mxu0
    %730 = vdwg.mxu0
    %731 = vst [vmem:[#allocation8] sm:$0xff] %v726
    // Predicated region
    $region26: #{tpu_custom_call.1} parent=1 // pred_check
      _
    $region27: #{tpu_custom_call.1} parent=1 // pred_check_branch
      %733 = sbr.rel (0) target = $region29
    $region28: #{tpu_custom_call.1} parent=1 // pred_region
      %s735 = ssub.s32 128, 128
      %736 = vsyncadd [#allocation4], %s735
      %s738 = sshll.u32 [#allocation8], 4
      %s739 = int_to_ptr.vmem [resolvable:$true] %s738
      %741 = dma.vmem_to_hbm [thread:$0]  %s739, 128, %s3, [#allocation4]
    $region29: #{tpu_custom_call.1} parent=1 // pred_fallthru
      _
    // Predicated region
    $region30: #{tpu_custom_call.1} parent=1 // pred_check
      _
    $region31: #{tpu_custom_call.1} parent=1 // pred_check_branch
      %743 = sbr.rel (0) target = $region33
    $region32: #{tpu_custom_call.1} parent=1 // pred_region
      %744 = dma.done [#allocation4], 128
    $region33: #{tpu_custom_call.1} parent=1 // pred_fallthru
      _
    %745 = vsyncpa [#allocation3], 1
    %746 = vsyncpa [#allocation6], 1
    %747 = vsyncpa [#allocation4], 1

</llo_original>
